<compile_context>
chip_gen: v6e
topology: v6e:2x2x1
jax: 0.10.0
libtpu: 0.0.40
codegen_flags: <defaults>
</compile_context>

<pallas_src>
import functools
import math

import jax
import jax.numpy as jnp
from jax.experimental import pallas as pl
from jax.experimental.pallas import tpu as pltpu


def _sublane_multiple(dtype) -> int:
    itemsize = jnp.dtype(dtype).itemsize
    if itemsize >= 4:
        return 8
    if itemsize == 2:
        return 16
    return 32


def _round_up(x: int, m: int) -> int:
    return ((x + m - 1) // m) * m


def _vmem_budget_and_limit():
    """Generation-aware (budget, scoped-limit) in bytes."""
    cap = 64 * 1024 * 1024  # conservative fallback: assume v7x-sized VMEM
    try:
        cap = int(pltpu.get_tpu_info().vmem_capacity_bytes)
    except Exception:
        pass
    if cap > 96 * 1024 * 1024:           # v5e / v6e: 128 MiB physical VMEM
        return 40 * 1024 * 1024, 80 * 1024 * 1024
    return 20 * 1024 * 1024, 40 * 1024 * 1024   # v7x: 64 MiB physical VMEM


def _pick_tile_rows(lane_dim, in_bytes, out_bytes, sub_mult, budget_bytes, extra_bytes):
    # Per folded row: double-buffered input + output pipeline blocks, plus ~3
    # full-size float32 temporaries (x upcast, x*x, normalized product).
    per_row = lane_dim * (2 * (in_bytes + out_bytes) + 3 * 4)
    avail = max(budget_bytes - extra_bytes, per_row * sub_mult)
    tile = (avail // per_row // sub_mult) * sub_mult
    return int(max(sub_mult, tile))


def _rmsnorm_kernel(x_ref, w_ref, o_ref, *, epsilon):
    # x_ref: (TILE, dim); one logical row per block row.
    x = x_ref[...].astype(jnp.float32)                       # x.float()
    inv = jax.lax.rsqrt(jnp.mean(x * x, axis=-1, keepdims=True) + epsilon)
    normed = (x * inv).astype(x_ref.dtype)                   # .type_as(x)
    o_ref[...] = (w_ref[...] * normed).astype(o_ref.dtype)   # weight * x


def _rmsnorm_fold_kernel(x_ref, w_ref, s_ref, o_ref, *, epsilon, dim):
    # x_ref: (TILE, fold*dim) — each block row packs `fold` logical rows along
    # the lane axis.  s_ref is a constant block-diagonal ones matrix, so one
    # MXU matmul produces every lane's own-segment sum (no cross-lane VPU/XLU
    # work, no cross-row mixing).
    x = x_ref[...].astype(jnp.float32)                       # x.float()
    xx = x * x
    seg_sums = jnp.dot(xx, s_ref[...], preferred_element_type=jnp.float32)
    inv = jax.lax.rsqrt(seg_sums * (1.0 / dim) + epsilon)
    normed = (x * inv).astype(x_ref.dtype)                   # .type_as(x)
    o_ref[...] = (w_ref[...] * normed).astype(o_ref.dtype)   # weight * x


def rms_norm(x, weight, epsilon=1e-8, tile_rows=None):
    """x: (..., dim), weight: (dim,).  Matches torch RMSNorm.forward."""
    orig_shape = x.shape
    dim = orig_shape[-1]
    rows = int(math.prod(orig_shape[:-1])) if len(orig_shape) > 1 else 1

    # Output dtype follows torch promotion of weight * x.type_as(x).
    out_dtype = jnp.result_type(weight.dtype, x.dtype)

    # Lane-fold small dims so the last (lane) axis is 128-dense.  The fold is a
    # free row-major reshape.  If the full fold doesn't divide the row count,
    # drop to a smaller power-of-two fold (no padding ever needed).
    fold = 1
    if dim < 128 and 128 % dim == 0 and rows > 0:
        f = 128 // dim                      # power of two
        while f > 1 and rows % f != 0:
            f //= 2
        fold = f
    lane_dim = fold * dim
    folded_rows = rows // fold

    sub_mult = max(_sublane_multiple(x.dtype), _sublane_multiple(out_dtype))
    budget, vmem_limit = _vmem_budget_and_limit()
    extra = lane_dim * jnp.dtype(weight.dtype).itemsize
    if fold > 1:
        extra += lane_dim * lane_dim * 4    # resident S matrix

    if tile_rows is None:
        tile_rows = _pick_tile_rows(
            lane_dim, jnp.dtype(x.dtype).itemsize, jnp.dtype(out_dtype).itemsize,
            sub_mult, budget, extra)
    tile_rows = max(sub_mult, (int(tile_rows) // sub_mult) * sub_mult)

    # Target >= 4 grid steps (>= 2 per TensorCore on v7x) when there is enough
    # data, so both cores get a real double-buffered pipeline.
    min_steps = 4
    if pl.cdiv(folded_rows, tile_rows) < min_steps and folded_rows > min_steps * sub_mult:
        tile_rows = max(sub_mult, _round_up(pl.cdiv(folded_rows, min_steps), sub_mult))
    if tile_rows >= folded_rows:
        tile_rows = _round_up(max(folded_rows, 1), sub_mult)

    x2d = x.reshape(folded_rows, lane_dim)  # free row-major reshape
    w_row = (jnp.tile(weight, fold) if fold > 1 else weight).reshape(1, lane_dim)

    # Non-divisible grid: Pallas masks the partial edge block; garbage in the
    # over-run rows never reaches valid rows (row-independent op).
    grid = (pl.cdiv(folded_rows, tile_rows),)

    if fold > 1:
        idx = jnp.arange(lane_dim)
        seg = idx // dim
        s_mat = (seg[:, None] == seg[None, :]).astype(jnp.float32)
        kernel = functools.partial(_rmsnorm_fold_kernel, epsilon=epsilon, dim=dim)
        in_specs = [
            pl.BlockSpec((tile_rows, lane_dim), lambda i: (i, 0)),
            pl.BlockSpec((1, lane_dim), lambda i: (0, 0)),
            pl.BlockSpec((lane_dim, lane_dim), lambda i: (0, 0)),
        ]
        args = (x2d, w_row, s_mat)
    else:
        kernel = functools.partial(_rmsnorm_kernel, epsilon=epsilon)
        in_specs = [
            pl.BlockSpec((tile_rows, lane_dim), lambda i: (i, 0)),
            pl.BlockSpec((1, lane_dim), lambda i: (0, 0)),
        ]
        args = (x2d, w_row)

    out = pl.pallas_call(
        kernel,
        out_shape=jax.ShapeDtypeStruct((folded_rows, lane_dim), out_dtype),
        grid_spec=pltpu.PrefetchScalarGridSpec(
            num_scalar_prefetch=0,
            grid=grid,
            in_specs=in_specs,
            out_specs=pl.BlockSpec((tile_rows, lane_dim), lambda i: (i, 0)),
        ),
        compiler_params=pltpu.CompilerParams(
            dimension_semantics=("parallel",),
            vmem_limit_bytes=vmem_limit,
        ),
    )(*args)

    return out.reshape(orig_shape)


def rms_norm_reference(x, weight, epsilon=1e-8):
    xf = x.astype(jnp.float32)
    normed = xf * jax.lax.rsqrt(jnp.mean(xf * xf, axis=-1, keepdims=True) + epsilon)
    normed = normed.astype(x.dtype)
    return weight * normed


if __name__ == "__main__":
    key = jax.random.PRNGKey(0)
    batch, seq, hidden = 2, 8, 32

    kx, kw, kx2 = jax.random.split(key, 3)
    x = jax.random.normal(kx, (batch, seq, hidden), dtype=jnp.float32)
    weight = jnp.ones((hidden,), dtype=jnp.float32)   # nn.Parameter(torch.ones(dim))

    out = jax.block_until_ready(rms_norm(x, weight, epsilon=1e-8))
    ref = rms_norm_reference(x, weight, epsilon=1e-8)
    assert out.shape == ref.shape and out.dtype == ref.dtype
    assert jnp.allclose(out, ref, atol=1e-5, rtol=1e-5)

    # Non-trivial weight -> exercises the lane-folded (MXU segmented-sum) path.
    w2 = jax.random.normal(kw, (hidden,), dtype=jnp.float32)
    out2 = jax.block_until_ready(rms_norm(x, w2, epsilon=1e-8))
    ref2 = rms_norm_reference(x, w2, epsilon=1e-8)
    assert jnp.allclose(out2, ref2, atol=1e-5, rtol=1e-5)

    # fold=1 path with a non-divisible grid (partial edge block, no padding).
    x3 = jax.random.normal(kx2, (2, 37, 128), dtype=jnp.float32)
    w3 = jnp.ones((128,), dtype=jnp.float32)
    out3 = jax.block_until_ready(rms_norm(x3, w3, epsilon=1e-8, tile_rows=16))
    ref3 = rms_norm_reference(x3, w3, epsilon=1e-8)
    assert jnp.allclose(out3, ref3, atol=1e-5, rtol=1e-5)

    print("KERNEL_OK")
</pallas_src>

<mosaic_0001>
module attributes {stable_mosaic.version = 11 : i64} {
  func.func @_rmsnorm_fold_kernel(%arg0: i32, %arg1: memref<8x128xf32, #tpu.memory_space<vmem>>, %arg2: memref<1x128xf32, #tpu.memory_space<vmem>>, %arg3: memref<128x128xf32, #tpu.memory_space<vmem>>, %arg4: memref<8x128xf32, #tpu.memory_space<vmem>>) attributes {dimension_semantics = [#tpu.dimension_semantics<parallel>], iteration_bounds = array<i64: 1>, scalar_prefetch = 0 : i64, scratch_operands = 0 : i64, tpu.core_type = #tpu.core_type<tc>, window_params = [{transform_indices = @transform_0, window_bounds = array<i64: 8, 128>}, {pipeline_mode = #tpu.pipeline_mode<synchronous>, transform_indices = @transform_1, window_bounds = array<i64: 1, 128>}, {pipeline_mode = #tpu.pipeline_mode<synchronous>, transform_indices = @transform_2, window_bounds = array<i64: 128, 128>}, {transform_indices = @transform_3, window_bounds = array<i64: 8, 128>}]} {
    %c0 = arith.constant 0 : index
    %c0_0 = arith.constant 0 : index
    %0 = vector.load %arg1[%c0, %c0_0] : memref<8x128xf32, #tpu.memory_space<vmem>>, vector<8x128xf32>
    %1 = arith.mulf %0, %0 : vector<8x128xf32>
    %c0_1 = arith.constant 0 : index
    %c0_2 = arith.constant 0 : index
    %2 = vector.load %arg3[%c0_1, %c0_2] : memref<128x128xf32, #tpu.memory_space<vmem>>, vector<128x128xf32>
    %cst = arith.constant dense<0.000000e+00> : vector<8x128xf32>
    %3 = tpu.matmul %1, %2, %cst {dimension_numbers = #tpu.dot_dimension_numbers<[1], [0], [0], [1], [0, 0, 1, 1], [], []>} : vector<8x128xf32>, vector<128x128xf32>, vector<8x128xf32> -> vector<8x128xf32>
    %cst_3 = arith.constant 3.125000e-02 : f32
    %4 = vector.broadcast %cst_3 : f32 to vector<8x128xf32>
    %5 = arith.mulf %3, %4 : vector<8x128xf32>
    %cst_4 = arith.constant 9.99999993E-9 : f32
    %6 = vector.broadcast %cst_4 : f32 to vector<8x128xf32>
    %7 = arith.addf %5, %6 : vector<8x128xf32>
    %8 = math.rsqrt %7 : vector<8x128xf32>
    %9 = arith.mulf %0, %8 : vector<8x128xf32>
    %c0_5 = arith.constant 0 : index
    %c0_6 = arith.constant 0 : index
    %10 = vector.load %arg2[%c0_5, %c0_6] : memref<1x128xf32, #tpu.memory_space<vmem>>, vector<1x128xf32>
    %11 = vector.broadcast %10 : vector<1x128xf32> to vector<8x128xf32>
    %12 = arith.mulf %11, %9 : vector<8x128xf32>
    %c0_7 = arith.constant 0 : index
    %c0_8 = arith.constant 0 : index
    %13 = vector.load %arg4[%c0_7, %c0_8] : memref<8x128xf32, #tpu.memory_space<vmem>>, vector<8x128xf32>
    tpu.vector_store %arg4[%c0_7, %c0_8], %12 {strides = array<i32>} : memref<8x128xf32, #tpu.memory_space<vmem>>, vector<8x128xf32>,
    return
  }
  func.func @transform_0(%arg0: i32) -> (i32, i32) {
    %c0_i32 = arith.constant 0 : i32
    %c0_i32_0 = arith.constant 0 : i32
    return %arg0, %c0_i32 : i32, i32
  }
  func.func @transform_1(%arg0: i32) -> (i32, i32) {
    %c0_i32 = arith.constant 0 : i32
    %c0_i32_0 = arith.constant 0 : i32
    %c0_i32_1 = arith.constant 0 : i32
    return %c0_i32, %c0_i32_0 : i32, i32
  }
  func.func @transform_2(%arg0: i32) -> (i32, i32) {
    %c0_i32 = arith.constant 0 : i32
    %c0_i32_0 = arith.constant 0 : i32
    %c0_i32_1 = arith.constant 0 : i32
    return %c0_i32, %c0_i32_0 : i32, i32
  }
  func.func @transform_3(%arg0: i32) -> (i32, i32) {
    %c0_i32 = arith.constant 0 : i32
    %c0_i32_0 = arith.constant 0 : i32
    return %arg0, %c0_i32 : i32, i32
  }
}

</mosaic_0001>

<llo_original>
// kernel: tpu_custom_call.1
$region0: #{tpu_custom_call.1}
  #allocation0 [shape = 'u32[]', space=smem, size = 0x4, offset = 0x4, fixed_abs, tag = 'smem constant byte address 0x4 - core index']
  #allocation1 [shape = 'u32[144,128]{1,0:T(1,128)}', space=vmem, size = 0x12000, scoped, tag = 'internal scratch']
  %s0 = inlined_call_operand.hbm [shape: f32[4,128], index: 0, kind: input, shape index: {}]
  %s1 = inlined_call_operand.vmem [shape: f32[1,128], index: 1, kind: input, shape index: {}]
  %s2 = inlined_call_operand.hbm [shape: f32[128,128], index: 2, kind: input, shape index: {}]
  %s3 = inlined_call_operand.hbm [shape: f32[4,128], index: 3, kind: output, shape index: {}]
  %s4 = sld [smem:[#allocation0]]
  $region30: #{tpu_custom_call.1} parent=0
    _
  %s6 = ssub.s32 1, %s4
  %s7 = scalar_select 0, %s6, %s4
  $region1: #{tpu_custom_call.1} parent=0
    #allocation2 [shape = 'u8[4096]{0}', space=vmem, size = 0x1000, scoped, tag = 'input window, operand 0, single buffered']
    #allocation3 [shape = 's32[1]{0}', space=sflag, size = 0x4, scoped, tag = 'scoped memory for tpu_custom_call.1']
    #allocation4 [shape = 's32[1]{0}', space=sflag, size = 0x4, scoped, tag = 'scoped memory for tpu_custom_call.1']
    #allocation5 [shape = 'u8[65536]{0}', space=vmem, size = 0x10000, scoped, tag = 'input window, operand 2, single buffered']
    #allocation6 [shape = 's32[1]{0}', space=sflag, size = 0x4, scoped, tag = 'scoped memory for tpu_custom_call.1']
    #allocation7 [shape = 'u8[4096]{0}', space=vmem, size = 0x1000, scoped, tag = 'output window, operand 0, single buffered']
    %8 = vsyncpa [#allocation3], 0
    %9 = vsyncpa [#allocation6], 0
    %10 = vsyncpa [#allocation4], 0
    // Predicated region
    $region2: #{tpu_custom_call.1} parent=1 // pred_check
      _
    $region3: #{tpu_custom_call.1} parent=1 // pred_check_branch
      %12 = sbr.rel (0) target = $region5
    $region4: #{tpu_custom_call.1} parent=1 // pred_region
      %s14 = ssub.s32 128, 64
      %15 = vsyncadd [#allocation3], %s14
      %s16 = sshll.u32 [#allocation2], 4
      %s17 = int_to_ptr.vmem [resolvable:$true] %s16
      %22 = dma.hbm_to_vmem [thread:$0]  %s0, 64, %s17, [#allocation3], 64, 64, 4
    $region5: #{tpu_custom_call.1} parent=1 // pred_fallthru
      _
    // Predicated region
    $region6: #{tpu_custom_call.1} parent=1 // pred_check
      _
    $region7: #{tpu_custom_call.1} parent=1 // pred_check_branch
      %24 = sbr.rel (0) target = $region9
    $region8: #{tpu_custom_call.1} parent=1 // pred_region
      _
    $region9: #{tpu_custom_call.1} parent=1 // pred_fallthru
      _
    // Predicated region
    $region10: #{tpu_custom_call.1} parent=1 // pred_check
      _
    $region11: #{tpu_custom_call.1} parent=1 // pred_check_branch
      %26 = sbr.rel (0) target = $region13
    $region12: #{tpu_custom_call.1} parent=1 // pred_region
      %s28 = ssub.s32 2048, 2048
      %29 = vsyncadd [#allocation6], %s28
      %s30 = sshll.u32 [#allocation5], 4
      %s31 = int_to_ptr.vmem [resolvable:$true] %s30
      %36 = dma.hbm_to_vmem [thread:$0]  %s2, 2048, %s31, [#allocation6], 128, 128, 8
    $region13: #{tpu_custom_call.1} parent=1 // pred_fallthru
      _
    // Predicated region
    $region14: #{tpu_custom_call.1} parent=1 // pred_check
      _
    $region15: #{tpu_custom_call.1} parent=1 // pred_check_branch
      %38 = sbr.rel (0) target = $region17
    $region16: #{tpu_custom_call.1} parent=1 // pred_region
      %39 = dma.done [#allocation3], 128
    $region17: #{tpu_custom_call.1} parent=1 // pred_fallthru
      _
    // Predicated region
    $region18: #{tpu_custom_call.1} parent=1 // pred_check
      _
    $region19: #{tpu_custom_call.1} parent=1 // pred_check_branch
      %41 = sbr.rel (0) target = $region21
    $region20: #{tpu_custom_call.1} parent=1 // pred_region
      %42 = dma.done [#allocation6], 2048
    $region21: #{tpu_custom_call.1} parent=1 // pred_fallthru
      _
    %v43 = vld [vmem:[#allocation2] sm:$0xff]
    %v44 = vmul.f32 %v43, %v43
    %v45 = vld [vmem:[#allocation5] sm:$0xff]
    %v46 = vld [vmem:[#allocation5 + $0x8] sm:$0xff]
    %v47 = vld [vmem:[#allocation5 + $0x10] sm:$0xff]
    %v48 = vld [vmem:[#allocation5 + $0x18] sm:$0xff]
    %v49 = vld [vmem:[#allocation5 + $0x20] sm:$0xff]
    %v50 = vld [vmem:[#allocation5 + $0x28] sm:$0xff]
    %v51 = vld [vmem:[#allocation5 + $0x30] sm:$0xff]
    %v52 = vld [vmem:[#allocation5 + $0x38] sm:$0xff]
    %v53 = vld [vmem:[#allocation5 + $0x40] sm:$0xff]
    %v54 = vld [vmem:[#allocation5 + $0x48] sm:$0xff]
    %v55 = vld [vmem:[#allocation5 + $0x50] sm:$0xff]
    %v56 = vld [vmem:[#allocation5 + $0x58] sm:$0xff]
    %v57 = vld [vmem:[#allocation5 + $0x60] sm:$0xff]
    %v58 = vld [vmem:[#allocation5 + $0x68] sm:$0xff]
    %v59 = vld [vmem:[#allocation5 + $0x70] sm:$0xff]
    %v60 = vld [vmem:[#allocation5 + $0x78] sm:$0xff]
    %61 = vmatprep.subr.mxu0 0.0
    %62 = vmatpush1.msra.mxu0 %v60
    %63 = vmatprep.subr.mxu0 0.0
    %64 = vmatpush1.msra.mxu0 %v59
    %65 = vmatprep.subr.mxu0 0.0
    %66 = vmatpush1.msra.mxu0 %v58
    %67 = vmatprep.subr.mxu0 0.0
    %68 = vmatpush1.msra.mxu0 %v57
    %69 = vmatprep.subr.mxu0 0.0
    %70 = vmatpush1.msra.mxu0 %v56
    %71 = vmatprep.subr.mxu0 0.0
    %72 = vmatpush1.msra.mxu0 %v55
    %73 = vmatprep.subr.mxu0 0.0
    %74 = vmatpush1.msra.mxu0 %v54
    %75 = vmatprep.subr.mxu0 0.0
    %76 = vmatpush1.msra.mxu0 %v53
    %77 = vmatprep.subr.mxu0 0.0
    %78 = vmatpush1.msra.mxu0 %v52
    %79 = vmatprep.subr.mxu0 0.0
    %80 = vmatpush1.msra.mxu0 %v51
    %81 = vmatprep.subr.mxu0 0.0
    %82 = vmatpush1.msra.mxu0 %v50
    %83 = vmatprep.subr.mxu0 0.0
    %84 = vmatpush1.msra.mxu0 %v49
    %85 = vmatprep.subr.mxu0 0.0
    %86 = vmatpush1.msra.mxu0 %v48
    %87 = vmatprep.subr.mxu0 0.0
    %88 = vmatpush1.msra.mxu0 %v47
    %89 = vmatprep.subr.mxu0 0.0
    %90 = vmatpush1.msra.mxu0 %v46
    %91 = vmatprep.subr.mxu0 0.0
    %92 = vmatpush1.msra.mxu0 %v45
    %93 = vmatprep.subr.mxu0 0.0
    %94 = vmatpush2.msra.mxu0 0.0
    %95 = vmatprep.subr.mxu0 0.0
    %96 = vmatpush2.msra.mxu0 0.0
    %97 = vmatprep.subr.mxu0 0.0
    %98 = vmatpush2.msra.mxu0 0.0
    %99 = vmatprep.subr.mxu0 0.0
    %100 = vmatpush2.msra.mxu0 0.0
    %101 = vmatprep.subr.mxu0 0.0
    %102 = vmatpush2.msra.mxu0 0.0
    %103 = vmatprep.subr.mxu0 0.0
    %104 = vmatpush2.msra.mxu0 0.0
    %105 = vmatprep.subr.mxu0 0.0
    %106 = vmatpush2.msra.mxu0 0.0
    %107 = vmatprep.subr.mxu0 0.0
    %108 = vmatpush2.msra.mxu0 0.0
    %109 = vmatprep.subr.mxu0 0.0
    %110 = vmatpush2.msra.mxu0 0.0
    %111 = vmatprep.subr.mxu0 0.0
    %112 = vmatpush2.msra.mxu0 0.0
    %113 = vmatprep.subr.mxu0 0.0
    %114 = vmatpush2.msra.mxu0 0.0
    %115 = vmatprep.subr.mxu0 0.0
    %116 = vmatpush2.msra.mxu0 0.0
    %117 = vmatprep.subr.mxu0 0.0
    %118 = vmatpush2.msra.mxu0 0.0
    %119 = vmatprep.subr.mxu0 0.0
    %120 = vmatpush2.msra.mxu0 0.0
    %121 = vmatprep.subr.mxu0 0.0
    %122 = vmatpush2.msra.mxu0 0.0
    %123 = vmatprep.subr.mxu0 0.0
    %124 = vmatpush2.msra.mxu0 0.0
    %125 = vmatprep.mubr.f32.mxu0 0.0
    %126 = vmatmul.mubr.f32.gmra.mxu0 %v44
    %v127 = vpop.f32.mrf.mxu0
    %v128 = vadd.f32 0.0, %v127
    %v129 = vpop.f32.mrf.mxu0
    %130 = vdwg.mxu0
    %v131 = vmul.f32 %v128, 0.03125
    %v132 = vadd.f32 %v131, 1e-08
    %v133 = vrsqrt.pop %v132
    %v134 = vmul.f32 %v43, %v133
    %v135 = vld [vmem:[%s1] sm:$0x1]
    %v137 = vlaneseq
    %v138 = vshrl.u32 %v137, 7
    %v139 = vsub.s32 0, %v138
    %v140 = vrot.slane %v135, %v139
    %v142 = vmul.f32 %v140, %v134
    %143 = vst [vmem:[#allocation7] sm:$0xff] %v142
    // Predicated region
    $region22: #{tpu_custom_call.1} parent=1 // pred_check
      _
    $region23: #{tpu_custom_call.1} parent=1 // pred_check_branch
      %145 = sbr.rel (0) target = $region25
    $region24: #{tpu_custom_call.1} parent=1 // pred_region
      %s147 = ssub.s32 128, 64
      %148 = vsyncadd [#allocation4], %s147
      %s149 = sshll.u32 [#allocation7], 4
      %s150 = int_to_ptr.vmem [resolvable:$true] %s149
      %155 = dma.vmem_to_hbm [thread:$0]  %s150, 64, %s3, [#allocation4], 64, 64, 4
    $region25: #{tpu_custom_call.1} parent=1 // pred_fallthru
      _
    // Predicated region
    $region26: #{tpu_custom_call.1} parent=1 // pred_check
      _
    $region27: #{tpu_custom_call.1} parent=1 // pred_check_branch
      %157 = sbr.rel (0) target = $region29
    $region28: #{tpu_custom_call.1} parent=1 // pred_region
      %158 = dma.done [#allocation4], 128
    $region29: #{tpu_custom_call.1} parent=1 // pred_fallthru
      _
    %159 = vsyncpa [#allocation3], 1
    %160 = vsyncpa [#allocation6], 1
    %161 = vsyncpa [#allocation4], 1

</llo_original>
